<compile_context>
chip_gen: v7x
topology: tpu7x:2x2x1
jax: 0.10.0
libtpu: 0.0.40
codegen_flags: <defaults>
</compile_context>

<pallas_src>
import functools

import jax
import jax.numpy as jnp
from jax import lax
from jax.experimental import pallas as pl
from jax.experimental.pallas import tpu as pltpu


def _zero_conv2d_kernel(x_ref, w_ref, o_ref, s_ref, p_ref, *, W, img_off):
    # x_ref : (N, Cin, HW)        input images, flattened spatial (lane-dense)
    # w_ref : (Cout, K_mat)       gate-folded im2col weights (+ bias column)
    # o_ref : (N, Cout, HW)       output, flattened spatial (lane-dense)
    # s_ref : (N, Cin_p, S_L)     scratch: ones-padded flattened images
    # p_ref : (K_mat, N*HW)       scratch: im2col patch matrix
    N, Cin, HW = x_ref.shape
    Cin_p = s_ref.shape[1]
    s_lanes = s_ref.shape[2]
    K_base = 9 * Cin_p
    K_mat = p_ref.shape[0]

    # --- ones-padded flat images: fill ONLY the guard strips and the padded
    #     channel rows (interior is overwritten by the image copy) -----------
    guard = jnp.ones((N, Cin_p, img_off), jnp.float32)
    s_ref[:, :, 0:img_off] = guard                     # leading lane guard
    s_ref[:, :, img_off + HW:] = guard                 # trailing lane guard
    if Cin_p > Cin:
        # padded-channel rows are all 1.0 (zero weights; also serve as the
        # free bias ones-row via the center tap).
        s_ref[:, Cin:, :] = jnp.ones((N, Cin_p - Cin, s_lanes), jnp.float32)
    s_ref[:, 0:Cin, img_off:img_off + HW] = x_ref[...].astype(jnp.float32)

    # Explicit ones group for the bias only when Cin had no padded channels.
    if K_mat > K_base:
        p_ref[K_base:, :] = jnp.ones((K_mat - K_base, N * HW), jnp.float32)

    # --- hoisted left/right border masks (computed once, reused 6*N times) --
    col = lax.broadcasted_iota(jnp.int32, (Cin_p, HW), 1)
    if (W & (W - 1)) == 0:
        col = col & (W - 1)            # W is a power of two (common case)
    else:
        col = col % W
    valid_l = col >= 1                 # tap reads column col-1
    valid_r = col <= W - 2             # tap reads column col+1

    # --- im2col: 9 lane-shifted, border-masked taps per image ---------------
    for n in range(N):
        lane0 = n * HW                              # 128-aligned (HW mult of 128)
        for dy in range(3):
            for dx in range(3):
                ry, rx = dy - 1, dx - 1
                off = img_off + ry * W + rx         # static, always in-bounds
                tap = s_ref[n, :, off:off + HW]     # (Cin_p, HW) ref slice load
                if rx == -1:
                    tap = jnp.where(valid_l, tap, 1.0)
                elif rx == 1:
                    tap = jnp.where(valid_r, tap, 1.0)
                k = (dy * 3 + dx) * Cin_p
                p_ref[k:k + Cin_p, lane0:lane0 + HW] = tap   # aligned store

    # --- single MXU matmul over all taps and all images, f32 accumulation ---
    acc = jnp.dot(w_ref[...], p_ref[...], preferred_element_type=jnp.float32)
    for n in range(N):
        o_ref[n, :, :] = acc[:, n * HW:(n + 1) * HW].astype(o_ref.dtype)


def zero_conv2d(x_nchw, weight_oihw, bias, scale):
    """ZeroConv2d forward.

    Args:
      x_nchw:      (N, Cin, H, W)    NCHW activations (like PyTorch).
      weight_oihw: (Cout, Cin, 3, 3) conv weight (PyTorch layout).
      bias:        (Cout,)
      scale:       (1, Cout, 1, 1)   per-channel scale parameter.
    Returns:
      (N, Cout, H, W) output, NCHW.
    """
    N, Cin, H, W = x_nchw.shape
    Cout = weight_oihw.shape[0]
    HW = H * W

    Cin_p = ((Cin + 7) // 8) * 8              # pad channels to full sublane tiles
    K_base = 9 * Cin_p
    img_off = ((W + 1 + 127) // 128) * 128    # >= W+1 and 128-aligned
    s_lanes = img_off + HW + img_off          # leading/trailing guards

    # ---- parameter-only prep: fold exp(3*scale) gate and bias into weights -
    gate = jnp.exp(scale.reshape(Cout).astype(jnp.float32) * 3.0)        # (Cout,)
    w_t = jnp.transpose(weight_oihw, (0, 2, 3, 1))                       # (Cout,3,3,Cin)
    w_t = jnp.pad(w_t, ((0, 0), (0, 0), (0, 0), (0, Cin_p - Cin)))       # zero cols
    w_mat = w_t.reshape(Cout, K_base).astype(jnp.float32) * gate[:, None]
    b_col = bias.astype(jnp.float32) * gate                              # (Cout,)

    if Cin_p > Cin:
        # Free bias fold: the center-tap patch row of the first padded channel
        # is all 1.0 inside the kernel, so its weight column carries the bias.
        K_mat = K_base
        bias_col = 4 * Cin_p + Cin            # center tap (dy=1,dx=1), chan Cin
        w_mat = w_mat.at[:, bias_col].set(b_col)
    else:
        # No padded channel available: append a ones group of Cin_p patch rows;
        # bias lives in its first column, the rest are zero.
        K_mat = K_base + Cin_p
        extra = jnp.zeros((Cout, Cin_p), jnp.float32).at[:, 0].set(b_col)
        w_mat = jnp.concatenate([w_mat, extra], axis=1)
    w_mat = w_mat.astype(jnp.float32)

    # ---- activations: free reshape only (no transpose, no pad) -------------
    x_flat = x_nchw.reshape(N, Cin, HW)

    kernel = functools.partial(_zero_conv2d_kernel, W=W, img_off=img_off)

    out_flat = pl.pallas_call(
        kernel,
        out_shape=jax.ShapeDtypeStruct((N, Cout, HW), x_nchw.dtype),
        grid_spec=pltpu.PrefetchScalarGridSpec(
            num_scalar_prefetch=0,
            grid=(1,),                                    # whole batch in one step
            in_specs=[
                pl.BlockSpec((N, Cin, HW), lambda i: (0, 0, 0)),   # images
                pl.BlockSpec((Cout, K_mat), lambda i: (0, 0)),     # weights(+bias)
            ],
            out_specs=pl.BlockSpec((N, Cout, HW), lambda i: (0, 0, 0)),
            scratch_shapes=[
                pltpu.VMEM((N, Cin_p, s_lanes), jnp.float32),      # padded images
                pltpu.VMEM((K_mat, N * HW), jnp.float32),          # im2col patches
            ],
        ),
        compiler_params=pltpu.CompilerParams(
            dimension_semantics=("arbitrary",)),
    )(x_flat, w_mat)

    return out_flat.reshape(N, Cout, H, W)        # free reshape back to NCHW


def _reference(x_nchw, weight_oihw, bias, scale):
    """Pure-JAX reference matching the PyTorch forward."""
    x_pad = jnp.pad(x_nchw, ((0, 0), (0, 0), (1, 1), (1, 1)),
                    mode="constant", constant_values=1.0)
    out = lax.conv_general_dilated(
        x_pad, weight_oihw,
        window_strides=(1, 1), padding="VALID",
        dimension_numbers=("NCHW", "OIHW", "NCHW"),
    )
    out = out + bias.reshape(1, -1, 1, 1)
    out = out * jnp.exp(scale * 3.0)
    return out


if __name__ == "__main__":
    # Small shapes consistent with the module: batch=2, in_ch=4, out_ch=8, 16x16.
    N, Cin, Cout, H, W = 2, 4, 8, 16, 16

    key = jax.random.PRNGKey(0)
    kx, kw, kb, ks = jax.random.split(key, 4)

    x = jax.random.normal(kx, (N, Cin, H, W), dtype=jnp.float32)
    # NOTE: the module zero-initializes weight/bias/scale (untrained forward is
    # exactly zero).  Use non-zero values so the conv path is exercised.
    weight = 0.1 * jax.random.normal(kw, (Cout, Cin, 3, 3), dtype=jnp.float32)
    bias = 0.1 * jax.random.normal(kb, (Cout,), dtype=jnp.float32)
    scale = 0.1 * jax.random.normal(ks, (1, Cout, 1, 1), dtype=jnp.float32)

    out = zero_conv2d(x, weight, bias, scale)
    out = jax.block_until_ready(out)

    ref = _reference(x, weight, bias, scale)
    assert out.shape == (N, Cout, H, W), out.shape
    assert jnp.allclose(out, ref, atol=1e-4, rtol=1e-4), (
        float(jnp.max(jnp.abs(out - ref))))

    # Zero-init semantics of the module: all params zero -> output exactly zero
    # (still holds with the gate folded into the weights, since exp(0)=1).
    out_zero = zero_conv2d(x, jnp.zeros_like(weight), jnp.zeros_like(bias),
                           jnp.zeros_like(scale))
    out_zero = jax.block_until_ready(out_zero)
    assert jnp.allclose(out_zero, jnp.zeros_like(out_zero))

    print("KERNEL_OK")
</pallas_src>

<mosaic_0001>
module attributes {stable_mosaic.version = 11 : i64} {
  func.func @_zero_conv2d_kernel(%arg0: i32, %arg1: memref<2x4x256xf32, #tpu.memory_space<vmem>>, %arg2: memref<8x72xf32, #tpu.memory_space<vmem>>, %arg3: memref<2x8x256xf32, #tpu.memory_space<vmem>>, %arg4: memref<2x8x512xf32, #tpu.memory_space<vmem>>, %arg5: memref<72x512xf32, #tpu.memory_space<vmem>>) attributes {dimension_semantics = [#tpu.dimension_semantics<arbitrary>], iteration_bounds = array<i64: 1>, scalar_prefetch = 0 : i64, scratch_operands = 2 : i64, tpu.core_type = #tpu.core_type<tc>, window_params = [{pipeline_mode = #tpu.pipeline_mode<synchronous>, transform_indices = @transform_0, window_bounds = array<i64: 2, 4, 256>}, {pipeline_mode = #tpu.pipeline_mode<synchronous>, transform_indices = @transform_1, window_bounds = array<i64: 8, 72>}, {pipeline_mode = #tpu.pipeline_mode<synchronous>, transform_indices = @transform_2, window_bounds = array<i64: 2, 8, 256>}]} {
    %cst = arith.constant 1.000000e+00 : f32
    %0 = vector.broadcast %cst : f32 to vector<2x8x128xf32>
    %c0 = arith.constant 0 : index
    %c0_0 = arith.constant 0 : index
    %c0_1 = arith.constant 0 : index
    %1 = vector.load %arg4[%c0, %c0_0, %c0_1] : memref<2x8x512xf32, #tpu.memory_space<vmem>>, vector<2x8x128xf32>
    tpu.vector_store %arg4[%c0, %c0_0, %c0_1], %0 {strides = array<i32>} : memref<2x8x512xf32, #tpu.memory_space<vmem>>, vector<2x8x128xf32>,
    %c0_2 = arith.constant 0 : index
    %c0_3 = arith.constant 0 : index
    %c384 = arith.constant 384 : index
    %2 = vector.load %arg4[%c0_2, %c0_3, %c384] : memref<2x8x512xf32, #tpu.memory_space<vmem>>, vector<2x8x128xf32>
    tpu.vector_store %arg4[%c0_2, %c0_3, %c384], %0 {strides = array<i32>} : memref<2x8x512xf32, #tpu.memory_space<vmem>>, vector<2x8x128xf32>,
    %cst_4 = arith.constant 1.000000e+00 : f32
    %3 = vector.broadcast %cst_4 : f32 to vector<2x4x512xf32>
    %c0_5 = arith.constant 0 : index
    %c4 = arith.constant 4 : index
    %c0_6 = arith.constant 0 : index
    %4 = vector.load %arg4[%c0_5, %c4, %c0_6] : memref<2x8x512xf32, #tpu.memory_space<vmem>>, vector<2x4x512xf32>
    tpu.vector_store %arg4[%c0_5, %c4, %c0_6], %3 {strides = array<i32>} : memref<2x8x512xf32, #tpu.memory_space<vmem>>, vector<2x4x512xf32>,
    %c0_7 = arith.constant 0 : index
    %c0_8 = arith.constant 0 : index
    %c0_9 = arith.constant 0 : index
    %5 = vector.load %arg1[%c0_7, %c0_8, %c0_9] : memref<2x4x256xf32, #tpu.memory_space<vmem>>, vector<2x4x256xf32>
    %c0_10 = arith.constant 0 : index
    %c0_11 = arith.constant 0 : index
    %c128 = arith.constant 128 : index
    %6 = vector.load %arg4[%c0_10, %c0_11, %c128] : memref<2x8x512xf32, #tpu.memory_space<vmem>>, vector<2x4x256xf32>
    tpu.vector_store %arg4[%c0_10, %c0_11, %c128], %5 {strides = array<i32>} : memref<2x8x512xf32, #tpu.memory_space<vmem>>, vector<2x4x256xf32>,
    %7 = tpu.iota {dimensions = array<i32: 1>} : vector<8x256xi32>
    %c15_i32 = arith.constant 15 : i32
    %8 = vector.broadcast %c15_i32 : i32 to vector<8x256xi32>
    %9 = arith.andi %7, %8 : vector<8x256xi32>
    %c1_i32 = arith.constant 1 : i32
    %10 = vector.broadcast %c1_i32 : i32 to vector<8x256xi32>
    %11 = arith.cmpi sge, %9, %10 : vector<8x256xi32>
    %c14_i32 = arith.constant 14 : i32
    %12 = vector.broadcast %c14_i32 : i32 to vector<8x256xi32>
    %13 = arith.cmpi sle, %9, %12 : vector<8x256xi32>
    %c0_12 = arith.constant 0 : index
    %c0_13 = arith.constant 0 : index
    %c111 = arith.constant 111 : index
    %14 = vector.load %arg4[%c0_12, %c0_13, %c111] : memref<2x8x512xf32, #tpu.memory_space<vmem>>, vector<1x8x256xf32>
    %15 = vector.shape_cast %14 : vector<1x8x256xf32> to vector<8x256xf32>
    %cst_14 = arith.constant 1.000000e+00 : f32
    %16 = vector.broadcast %cst_14 : f32 to vector<8x256xf32>
    %17 = arith.select %11, %15, %16 : vector<8x256xi1>, vector<8x256xf32>
    %c0_15 = arith.constant 0 : index
    %c0_16 = arith.constant 0 : index
    %18 = vector.load %arg5[%c0_15, %c0_16] : memref<72x512xf32, #tpu.memory_space<vmem>>, vector<8x256xf32>
    tpu.vector_store %arg5[%c0_15, %c0_16], %17 {strides = array<i32>} : memref<72x512xf32, #tpu.memory_space<vmem>>, vector<8x256xf32>,
    %c0_17 = arith.constant 0 : index
    %c0_18 = arith.constant 0 : index
    %c112 = arith.constant 112 : index
    %19 = vector.load %arg4[%c0_17, %c0_18, %c112] : memref<2x8x512xf32, #tpu.memory_space<vmem>>, vector<1x8x256xf32>
    %20 = vector.shape_cast %19 : vector<1x8x256xf32> to vector<8x256xf32>
    %c8 = arith.constant 8 : index
    %c0_19 = arith.constant 0 : index
    %21 = vector.load %arg5[%c8, %c0_19] : memref<72x512xf32, #tpu.memory_space<vmem>>, vector<8x256xf32>
    tpu.vector_store %arg5[%c8, %c0_19], %20 {strides = array<i32>} : memref<72x512xf32, #tpu.memory_space<vmem>>, vector<8x256xf32>,
    %c0_20 = arith.constant 0 : index
    %c0_21 = arith.constant 0 : index
    %c113 = arith.constant 113 : index
    %22 = vector.load %arg4[%c0_20, %c0_21, %c113] : memref<2x8x512xf32, #tpu.memory_space<vmem>>, vector<1x8x256xf32>
    %23 = vector.shape_cast %22 : vector<1x8x256xf32> to vector<8x256xf32>
    %cst_22 = arith.constant 1.000000e+00 : f32
    %24 = vector.broadcast %cst_22 : f32 to vector<8x256xf32>
    %25 = arith.select %13, %23, %24 : vector<8x256xi1>, vector<8x256xf32>
    %c16 = arith.constant 16 : index
    %c0_23 = arith.constant 0 : index
    %26 = vector.load %arg5[%c16, %c0_23] : memref<72x512xf32, #tpu.memory_space<vmem>>, vector<8x256xf32>
    tpu.vector_store %arg5[%c16, %c0_23], %25 {strides = array<i32>} : memref<72x512xf32, #tpu.memory_space<vmem>>, vector<8x256xf32>,
    %c0_24 = arith.constant 0 : index
    %c0_25 = arith.constant 0 : index
    %c127 = arith.constant 127 : index
    %27 = vector.load %arg4[%c0_24, %c0_25, %c127] : memref<2x8x512xf32, #tpu.memory_space<vmem>>, vector<1x8x256xf32>
    %28 = vector.shape_cast %27 : vector<1x8x256xf32> to vector<8x256xf32>
    %cst_26 = arith.constant 1.000000e+00 : f32
    %29 = vector.broadcast %cst_26 : f32 to vector<8x256xf32>
    %30 = arith.select %11, %28, %29 : vector<8x256xi1>, vector<8x256xf32>
    %c24 = arith.constant 24 : index
    %c0_27 = arith.constant 0 : index
    %31 = vector.load %arg5[%c24, %c0_27] : memref<72x512xf32, #tpu.memory_space<vmem>>, vector<8x256xf32>
    tpu.vector_store %arg5[%c24, %c0_27], %30 {strides = array<i32>} : memref<72x512xf32, #tpu.memory_space<vmem>>, vector<8x256xf32>,
    %c0_28 = arith.constant 0 : index
    %c0_29 = arith.constant 0 : index
    %c128_30 = arith.constant 128 : index
    %32 = vector.load %arg4[%c0_28, %c0_29, %c128_30] : memref<2x8x512xf32, #tpu.memory_space<vmem>>, vector<1x8x256xf32>
    %33 = vector.shape_cast %32 : vector<1x8x256xf32> to vector<8x256xf32>
    %c32 = arith.constant 32 : index
    %c0_31 = arith.constant 0 : index
    %34 = vector.load %arg5[%c32, %c0_31] : memref<72x512xf32, #tpu.memory_space<vmem>>, vector<8x256xf32>
    tpu.vector_store %arg5[%c32, %c0_31], %33 {strides = array<i32>} : memref<72x512xf32, #tpu.memory_space<vmem>>, vector<8x256xf32>,
    %c0_32 = arith.constant 0 : index
    %c0_33 = arith.constant 0 : index
    %c129 = arith.constant 129 : index
    %35 = vector.load %arg4[%c0_32, %c0_33, %c129] : memref<2x8x512xf32, #tpu.memory_space<vmem>>, vector<1x8x256xf32>
    %36 = vector.shape_cast %35 : vector<1x8x256xf32> to vector<8x256xf32>
    %cst_34 = arith.constant 1.000000e+00 : f32
    %37 = vector.broadcast %cst_34 : f32 to vector<8x256xf32>
    %38 = arith.select %13, %36, %37 : vector<8x256xi1>, vector<8x256xf32>
    %c40 = arith.constant 40 : index
    %c0_35 = arith.constant 0 : index
    %39 = vector.load %arg5[%c40, %c0_35] : memref<72x512xf32, #tpu.memory_space<vmem>>, vector<8x256xf32>
    tpu.vector_store %arg5[%c40, %c0_35], %38 {strides = array<i32>} : memref<72x512xf32, #tpu.memory_space<vmem>>, vector<8x256xf32>,
    %c0_36 = arith.constant 0 : index
    %c0_37 = arith.constant 0 : index
    %c143 = arith.constant 143 : index
    %40 = vector.load %arg4[%c0_36, %c0_37, %c143] : memref<2x8x512xf32, #tpu.memory_space<vmem>>, vector<1x8x256xf32>
    %41 = vector.shape_cast %40 : vector<1x8x256xf32> to vector<8x256xf32>
    %cst_38 = arith.constant 1.000000e+00 : f32
    %42 = vector.broadcast %cst_38 : f32 to vector<8x256xf32>
    %43 = arith.select %11, %41, %42 : vector<8x256xi1>, vector<8x256xf32>
    %c48 = arith.constant 48 : index
    %c0_39 = arith.constant 0 : index
    %44 = vector.load %arg5[%c48, %c0_39] : memref<72x512xf32, #tpu.memory_space<vmem>>, vector<8x256xf32>
    tpu.vector_store %arg5[%c48, %c0_39], %43 {strides = array<i32>} : memref<72x512xf32, #tpu.memory_space<vmem>>, vector<8x256xf32>,
    %c0_40 = arith.constant 0 : index
    %c0_41 = arith.constant 0 : index
    %c144 = arith.constant 144 : index
    %45 = vector.load %arg4[%c0_40, %c0_41, %c144] : memref<2x8x512xf32, #tpu.memory_space<vmem>>, vector<1x8x256xf32>
    %46 = vector.shape_cast %45 : vector<1x8x256xf32> to vector<8x256xf32>
    %c56 = arith.constant 56 : index
    %c0_42 = arith.constant 0 : index
    %47 = vector.load %arg5[%c56, %c0_42] : memref<72x512xf32, #tpu.memory_space<vmem>>, vector<8x256xf32>
    tpu.vector_store %arg5[%c56, %c0_42], %46 {strides = array<i32>} : memref<72x512xf32, #tpu.memory_space<vmem>>, vector<8x256xf32>,
    %c0_43 = arith.constant 0 : index
    %c0_44 = arith.constant 0 : index
    %c145 = arith.constant 145 : index
    %48 = vector.load %arg4[%c0_43, %c0_44, %c145] : memref<2x8x512xf32, #tpu.memory_space<vmem>>, vector<1x8x256xf32>
    %49 = vector.shape_cast %48 : vector<1x8x256xf32> to vector<8x256xf32>
    %cst_45 = arith.constant 1.000000e+00 : f32
    %50 = vector.broadcast %cst_45 : f32 to vector<8x256xf32>
    %51 = arith.select %13, %49, %50 : vector<8x256xi1>, vector<8x256xf32>
    %c64 = arith.constant 64 : index
    %c0_46 = arith.constant 0 : index
    %52 = vector.load %arg5[%c64, %c0_46] : memref<72x512xf32, #tpu.memory_space<vmem>>, vector<8x256xf32>
    tpu.vector_store %arg5[%c64, %c0_46], %51 {strides = array<i32>} : memref<72x512xf32, #tpu.memory_space<vmem>>, vector<8x256xf32>,
    %c1 = arith.constant 1 : index
    %c0_47 = arith.constant 0 : index
    %c111_48 = arith.constant 111 : index
    %53 = vector.load %arg4[%c1, %c0_47, %c111_48] : memref<2x8x512xf32, #tpu.memory_space<vmem>>, vector<1x8x256xf32>
    %54 = vector.shape_cast %53 : vector<1x8x256xf32> to vector<8x256xf32>
    %cst_49 = arith.constant 1.000000e+00 : f32
    %55 = vector.broadcast %cst_49 : f32 to vector<8x256xf32>
    %56 = arith.select %11, %54, %55 : vector<8x256xi1>, vector<8x256xf32>
    %c0_50 = arith.constant 0 : index
    %c256 = arith.constant 256 : index
    %57 = vector.load %arg5[%c0_50, %c256] : memref<72x512xf32, #tpu.memory_space<vmem>>, vector<8x256xf32>
    tpu.vector_store %arg5[%c0_50, %c256], %56 {strides = array<i32>} : memref<72x512xf32, #tpu.memory_space<vmem>>, vector<8x256xf32>,
    %c1_51 = arith.constant 1 : index
    %c0_52 = arith.constant 0 : index
    %c112_53 = arith.constant 112 : index
    %58 = vector.load %arg4[%c1_51, %c0_52, %c112_53] : memref<2x8x512xf32, #tpu.memory_space<vmem>>, vector<1x8x256xf32>
    %59 = vector.shape_cast %58 : vector<1x8x256xf32> to vector<8x256xf32>
    %c8_54 = arith.constant 8 : index
    %c256_55 = arith.constant 256 : index
    %60 = vector.load %arg5[%c8_54, %c256_55] : memref<72x512xf32, #tpu.memory_space<vmem>>, vector<8x256xf32>
    tpu.vector_store %arg5[%c8_54, %c256_55], %59 {strides = array<i32>} : memref<72x512xf32, #tpu.memory_space<vmem>>, vector<8x256xf32>,
    %c1_56 = arith.constant 1 : index
    %c0_57 = arith.constant 0 : index
    %c113_58 = arith.constant 113 : index
    %61 = vector.load %arg4[%c1_56, %c0_57, %c113_58] : memref<2x8x512xf32, #tpu.memory_space<vmem>>, vector<1x8x256xf32>
    %62 = vector.shape_cast %61 : vector<1x8x256xf32> to vector<8x256xf32>
    %cst_59 = arith.constant 1.000000e+00 : f32
    %63 = vector.broadcast %cst_59 : f32 to vector<8x256xf32>
    %64 = arith.select %13, %62, %63 : vector<8x256xi1>, vector<8x256xf32>
    %c16_60 = arith.constant 16 : index
    %c256_61 = arith.constant 256 : index
    %65 = vector.load %arg5[%c16_60, %c256_61] : memref<72x512xf32, #tpu.memory_space<vmem>>, vector<8x256xf32>
    tpu.vector_store %arg5[%c16_60, %c256_61], %64 {strides = array<i32>} : memref<72x512xf32, #tpu.memory_space<vmem>>, vector<8x256xf32>,
    %c1_62 = arith.constant 1 : index
    %c0_63 = arith.constant 0 : index
    %c127_64 = arith.constant 127 : index
    %66 = vector.load %arg4[%c1_62, %c0_63, %c127_64] : memref<2x8x512xf32, #tpu.memory_space<vmem>>, vector<1x8x256xf32>
    %67 = vector.shape_cast %66 : vector<1x8x256xf32> to vector<8x256xf32>
    %cst_65 = arith.constant 1.000000e+00 : f32
    %68 = vector.broadcast %cst_65 : f32 to vector<8x256xf32>
    %69 = arith.select %11, %67, %68 : vector<8x256xi1>, vector<8x256xf32>
    %c24_66 = arith.constant 24 : index
    %c256_67 = arith.constant 256 : index
    %70 = vector.load %arg5[%c24_66, %c256_67] : memref<72x512xf32, #tpu.memory_space<vmem>>, vector<8x256xf32>
    tpu.vector_store %arg5[%c24_66, %c256_67], %69 {strides = array<i32>} : memref<72x512xf32, #tpu.memory_space<vmem>>, vector<8x256xf32>,
    %c1_68 = arith.constant 1 : index
    %c0_69 = arith.constant 0 : index
    %c128_70 = arith.constant 128 : index
    %71 = vector.load %arg4[%c1_68, %c0_69, %c128_70] : memref<2x8x512xf32, #tpu.memory_space<vmem>>, vector<1x8x256xf32>
    %72 = vector.shape_cast %71 : vector<1x8x256xf32> to vector<8x256xf32>
    %c32_71 = arith.constant 32 : index
    %c256_72 = arith.constant 256 : index
    %73 = vector.load %arg5[%c32_71, %c256_72] : memref<72x512xf32, #tpu.memory_space<vmem>>, vector<8x256xf32>
    tpu.vector_store %arg5[%c32_71, %c256_72], %72 {strides = array<i32>} : memref<72x512xf32, #tpu.memory_space<vmem>>, vector<8x256xf32>,
    %c1_73 = arith.constant 1 : index
    %c0_74 = arith.constant 0 : index
    %c129_75 = arith.constant 129 : index
    %74 = vector.load %arg4[%c1_73, %c0_74, %c129_75] : memref<2x8x512xf32, #tpu.memory_space<vmem>>, vector<1x8x256xf32>
    %75 = vector.shape_cast %74 : vector<1x8x256xf32> to vector<8x256xf32>
    %cst_76 = arith.constant 1.000000e+00 : f32
    %76 = vector.broadcast %cst_76 : f32 to vector<8x256xf32>
    %77 = arith.select %13, %75, %76 : vector<8x256xi1>, vector<8x256xf32>
    %c40_77 = arith.constant 40 : index
    %c256_78 = arith.constant 256 : index
    %78 = vector.load %arg5[%c40_77, %c256_78] : memref<72x512xf32, #tpu.memory_space<vmem>>, vector<8x256xf32>
    tpu.vector_store %arg5[%c40_77, %c256_78], %77 {strides = array<i32>} : memref<72x512xf32, #tpu.memory_space<vmem>>, vector<8x256xf32>,
    %c1_79 = arith.constant 1 : index
    %c0_80 = arith.constant 0 : index
    %c143_81 = arith.constant 143 : index
    %79 = vector.load %arg4[%c1_79, %c0_80, %c143_81] : memref<2x8x512xf32, #tpu.memory_space<vmem>>, vector<1x8x256xf32>
    %80 = vector.shape_cast %79 : vector<1x8x256xf32> to vector<8x256xf32>
    %cst_82 = arith.constant 1.000000e+00 : f32
    %81 = vector.broadcast %cst_82 : f32 to vector<8x256xf32>
    %82 = arith.select %11, %80, %81 : vector<8x256xi1>, vector<8x256xf32>
    %c48_83 = arith.constant 48 : index
    %c256_84 = arith.constant 256 : index
    %83 = vector.load %arg5[%c48_83, %c256_84] : memref<72x512xf32, #tpu.memory_space<vmem>>, vector<8x256xf32>
    tpu.vector_store %arg5[%c48_83, %c256_84], %82 {strides = array<i32>} : memref<72x512xf32, #tpu.memory_space<vmem>>, vector<8x256xf32>,
    %c1_85 = arith.constant 1 : index
    %c0_86 = arith.constant 0 : index
    %c144_87 = arith.constant 144 : index
    %84 = vector.load %arg4[%c1_85, %c0_86, %c144_87] : memref<2x8x512xf32, #tpu.memory_space<vmem>>, vector<1x8x256xf32>
    %85 = vector.shape_cast %84 : vector<1x8x256xf32> to vector<8x256xf32>
    %c56_88 = arith.constant 56 : index
    %c256_89 = arith.constant 256 : index
    %86 = vector.load %arg5[%c56_88, %c256_89] : memref<72x512xf32, #tpu.memory_space<vmem>>, vector<8x256xf32>
    tpu.vector_store %arg5[%c56_88, %c256_89], %85 {strides = array<i32>} : memref<72x512xf32, #tpu.memory_space<vmem>>, vector<8x256xf32>,
    %c1_90 = arith.constant 1 : index
    %c0_91 = arith.constant 0 : index
    %c145_92 = arith.constant 145 : index
    %87 = vector.load %arg4[%c1_90, %c0_91, %c145_92] : memref<2x8x512xf32, #tpu.memory_space<vmem>>, vector<1x8x256xf32>
    %88 = vector.shape_cast %87 : vector<1x8x256xf32> to vector<8x256xf32>
    %cst_93 = arith.constant 1.000000e+00 : f32
    %89 = vector.broadcast %cst_93 : f32 to vector<8x256xf32>
    %90 = arith.select %13, %88, %89 : vector<8x256xi1>, vector<8x256xf32>
    %c64_94 = arith.constant 64 : index
    %c256_95 = arith.constant 256 : index
    %91 = vector.load %arg5[%c64_94, %c256_95] : memref<72x512xf32, #tpu.memory_space<vmem>>, vector<8x256xf32>
    tpu.vector_store %arg5[%c64_94, %c256_95], %90 {strides = array<i32>} : memref<72x512xf32, #tpu.memory_space<vmem>>, vector<8x256xf32>,
    %c0_96 = arith.constant 0 : index
    %c0_97 = arith.constant 0 : index
    %92 = vector.load %arg2[%c0_96, %c0_97] : memref<8x72xf32, #tpu.memory_space<vmem>>, vector<8x72xf32>
    %c0_98 = arith.constant 0 : index
    %c0_99 = arith.constant 0 : index
    %93 = vector.load %arg5[%c0_98, %c0_99] : memref<72x512xf32, #tpu.memory_space<vmem>>, vector<72x512xf32>
    %cst_100 = arith.constant dense<0.000000e+00> : vector<8x512xf32>
    %94 = tpu.matmul %92, %93, %cst_100 {dimension_numbers = #tpu.dot_dimension_numbers<[1], [0], [0], [1], [0, 0, 1, 1], [], []>} : vector<8x72xf32>, vector<72x512xf32>, vector<8x512xf32> -> vector<8x512xf32>
    %95 = vector.extract_strided_slice %94 {offsets = [0, 0], sizes = [8, 256], strides = [1, 1]} : vector<8x512xf32> to vector<8x256xf32>
    %c0_101 = arith.constant 0 : index
    %c0_102 = arith.constant 0 : index
    %c0_103 = arith.constant 0 : index
    %96 = vector.load %arg3[%c0_101, %c0_102, %c0_103] : memref<2x8x256xf32, #tpu.memory_space<vmem>>, vector<1x8x256xf32>
    %97 = vector.shape_cast %96 : vector<1x8x256xf32> to vector<8x256xf32>
    %98 = vector.shape_cast %95 : vector<8x256xf32> to vector<1x8x256xf32>
    tpu.vector_store %arg3[%c0_101, %c0_102, %c0_103], %98 {strides = array<i32>} : memref<2x8x256xf32, #tpu.memory_space<vmem>>, vector<1x8x256xf32>,
    %99 = vector.extract_strided_slice %94 {offsets = [0, 256], sizes = [8, 256], strides = [1, 1]} : vector<8x512xf32> to vector<8x256xf32>
    %c1_104 = arith.constant 1 : index
    %c0_105 = arith.constant 0 : index
    %c0_106 = arith.constant 0 : index
    %100 = vector.load %arg3[%c1_104, %c0_105, %c0_106] : memref<2x8x256xf32, #tpu.memory_space<vmem>>, vector<1x8x256xf32>
    %101 = vector.shape_cast %100 : vector<1x8x256xf32> to vector<8x256xf32>
    %102 = vector.shape_cast %99 : vector<8x256xf32> to vector<1x8x256xf32>
    tpu.vector_store %arg3[%c1_104, %c0_105, %c0_106], %102 {strides = array<i32>} : memref<2x8x256xf32, #tpu.memory_space<vmem>>, vector<1x8x256xf32>,
    return
  }
  func.func @transform_0(%arg0: i32) -> (i32, i32, i32) {
    %c0_i32 = arith.constant 0 : i32
    %c0_i32_0 = arith.constant 0 : i32
    %c0_i32_1 = arith.constant 0 : i32
    %c0_i32_2 = arith.constant 0 : i32
    return %c0_i32, %c0_i32_0, %c0_i32_1 : i32, i32, i32
  }
  func.func @transform_1(%arg0: i32) -> (i32, i32) {
    %c0_i32 = arith.constant 0 : i32
    %c0_i32_0 = arith.constant 0 : i32
    %c0_i32_1 = arith.constant 0 : i32
    return %c0_i32, %c0_i32_0 : i32, i32
  }
  func.func @transform_2(%arg0: i32) -> (i32, i32, i32) {
    %c0_i32 = arith.constant 0 : i32
    %c0_i32_0 = arith.constant 0 : i32
    %c0_i32_1 = arith.constant 0 : i32
    %c0_i32_2 = arith.constant 0 : i32
    return %c0_i32, %c0_i32_0, %c0_i32_1 : i32, i32, i32
  }
}

</mosaic_0001>

<llo_original>
// kernel: tpu_custom_call.1
$region0: #{tpu_custom_call.1}
  #allocation0 [shape = 'u32[]', space=smem, size = 0x4, offset = 0x4, fixed_abs, tag = 'smem constant byte address 0x4 - core index']
  #allocation1 [shape = 'u32[144,128]{1,0:T(1,128)}', space=vmem, size = 0x12000, scoped, tag = 'internal scratch']
  #allocation2 [shape = 'f32[2,8,512]{2,1,0:T(8,128)}', space=vmem, size = 0x8000, scoped, tag = 'scratch operand']
  #allocation3 [shape = 'f32[72,512]{1,0:T(8,128)}', space=vmem, size = 0x24000, scoped, tag = 'scratch operand']
  %s0 = inlined_call_operand.hbm [shape: f32[2,4,256], index: 0, kind: input, shape index: {}]
  %s1 = inlined_call_operand.hbm [shape: f32[8,72], index: 1, kind: input, shape index: {}]
  %s2 = inlined_call_operand.hbm [shape: f32[2,8,256], index: 2, kind: output, shape index: {}]
  %s3 = sld [smem:[#allocation0]]
  $region26: #{tpu_custom_call.1} parent=0
    _
  %s5 = ssub.s32 1, %s3
  %s6 = scalar_select 0, %s5, %s3
  $region1: #{tpu_custom_call.1} parent=0
    #allocation4 [shape = 'u8[8192]{0}', space=vmem, size = 0x2000, scoped, tag = 'input window, operand 0, single buffered']
    #allocation5 [shape = 's32[1]{0}', space=sflag, size = 0x4, scoped, tag = 'scoped memory for tpu_custom_call.1']
    #allocation6 [shape = 's32[1]{0}', space=sflag, size = 0x4, scoped, tag = 'scoped memory for tpu_custom_call.1']
    #allocation7 [shape = 'u8[4096]{0}', space=vmem, size = 0x1000, scoped, tag = 'input window, operand 1, single buffered']
    #allocation8 [shape = 's32[1]{0}', space=sflag, size = 0x4, scoped, tag = 'scoped memory for tpu_custom_call.1']
    #allocation9 [shape = 'u8[16384]{0}', space=vmem, size = 0x4000, scoped, tag = 'output window, operand 0, single buffered']
    %7 = vsyncpa [#allocation5], 0
    %8 = vsyncpa [#allocation8], 0
    %9 = vsyncpa [#allocation6], 0
    // Predicated region
    $region2: #{tpu_custom_call.1} parent=1 // pred_check
      _
    $region3: #{tpu_custom_call.1} parent=1 // pred_check_branch
      %11 = sbr.rel (0) target = $region5
    $region4: #{tpu_custom_call.1} parent=1 // pred_region
      %s13 = ssub.s32 256, 256
      %14 = vsyncadd [#allocation5], %s13
      %s15 = sshll.u32 [#allocation4], 4
      %s16 = int_to_ptr.vmem [resolvable:$true] %s15
      %21 = dma.hbm_to_vmem [thread:$0]  %s0, 256, %s16, [#allocation5], 128, 128, 8
    $region5: #{tpu_custom_call.1} parent=1 // pred_fallthru
      _
    // Predicated region
    $region6: #{tpu_custom_call.1} parent=1 // pred_check
      _
    $region7: #{tpu_custom_call.1} parent=1 // pred_check_branch
      %23 = sbr.rel (0) target = $region9
    $region8: #{tpu_custom_call.1} parent=1 // pred_region
      %s25 = ssub.s32 128, 128
      %26 = vsyncadd [#allocation8], %s25
      %s28 = sshll.u32 [#allocation7], 4
      %s29 = int_to_ptr.vmem [resolvable:$true] %s28
      %31 = dma.hbm_to_vmem [thread:$0]  %s1, 128, %s29, [#allocation8]
    $region9: #{tpu_custom_call.1} parent=1 // pred_fallthru
      _
    // Predicated region
    $region10: #{tpu_custom_call.1} parent=1 // pred_check
      _
    $region11: #{tpu_custom_call.1} parent=1 // pred_check_branch
      %33 = sbr.rel (0) target = $region13
    $region12: #{tpu_custom_call.1} parent=1 // pred_region
      %34 = dma.done [#allocation5], 256
    $region13: #{tpu_custom_call.1} parent=1 // pred_fallthru
      _
    // Predicated region
    $region14: #{tpu_custom_call.1} parent=1 // pred_check
      _
    $region15: #{tpu_custom_call.1} parent=1 // pred_check_branch
      %36 = sbr.rel (0) target = $region17
    $region16: #{tpu_custom_call.1} parent=1 // pred_region
      %37 = dma.done [#allocation8], 128
    $region17: #{tpu_custom_call.1} parent=1 // pred_fallthru
      _
    %38 = vst [vmem:[#allocation2] sm:$0xff] 1.0
    %39 = vst [vmem:[#allocation2 + $0x20] sm:$0xff] 1.0
    %40 = vst [vmem:[#allocation2 + $0x18] sm:$0xff] 1.0
    %41 = vst [vmem:[#allocation2 + $0x38] sm:$0xff] 1.0
    %42 = vst [vmem:[#allocation2] sm:$0xf0] 1.0
    %43 = vst [vmem:[#allocation2 + $0x8] sm:$0xf0] 1.0
    %44 = vst [vmem:[#allocation2 + $0x10] sm:$0xf0] 1.0
    %45 = vst [vmem:[#allocation2 + $0x18] sm:$0xf0] 1.0
    %46 = vst [vmem:[#allocation2 + $0x20] sm:$0xf0] 1.0
    %47 = vst [vmem:[#allocation2 + $0x28] sm:$0xf0] 1.0
    %48 = vst [vmem:[#allocation2 + $0x30] sm:$0xf0] 1.0
    %49 = vst [vmem:[#allocation2 + $0x38] sm:$0xf0] 1.0
    %v50 = vld [vmem:[#allocation4] sm:$0xff]
    %v51 = vld [vmem:[#allocation4 + $0x8] sm:$0xff]
    %v54 = vcombine.high %v50, %v50
    %v55 = vcombine.high %v51, %v51
    %58 = vst [vmem:[#allocation2 + $0x8] sm:$0xf] %v50
    %59 = vst [vmem:[#allocation2 + $0x10] sm:$0xf] %v54
    %60 = vst [vmem:[#allocation2 + $0x28] sm:$0xf] %v51
    %61 = vst [vmem:[#allocation2 + $0x30] sm:$0xf] %v55
    %v62 = vlaneseq
    %v63 = vand.u32 %v62, 127
    %v64 = vadd.s32 %v63, 128
    %v65 = vand.u32 %v63, 15
    %v66 = vand.u32 %v64, 15
    %vm67 = vcmp.ge.s32.totalorder %v65, 1
    %vm68 = vcmp.ge.s32.totalorder %v66, 1
    %vm69 = vcmp.le.s32.totalorder %v65, 14
    %vm70 = vcmp.le.s32.totalorder %v66, 14
    %v71 = vld [vmem:[#allocation2] sm:$0xff]
    %v72 = vld [vmem:[#allocation2 + $0x8] sm:$0xff]
    %v73 = vld [vmem:[#allocation2 + $0x10] sm:$0xff]
    %77 = vrot.lane.b32.xlu0 %v71, 17
    %v78 = vpop.permute.xlu0 %77
    %79 = vrot.lane.b32.xlu0 %v72, 17
    %v80 = vpop.permute.xlu0 %79
    %81 = vrot.lane.b32.xlu0 %v73, 17
    %v82 = vpop.permute.xlu0 %81
    %vm83 = vcmask 138240
    %v84 = vsel %vm83, %v78, %v80
    %v85 = vsel %vm83, %v80, %v82
    %v88 = vsel %vm67, %v84, 1.0
    %v89 = vsel %vm68, %v85, 1.0
    %90 = vst [vmem:[#allocation3] sm:$0xff] %v88
    %91 = vst [vmem:[#allocation3 + $0x8] sm:$0xff] %v89
    %v92 = vld [vmem:[#allocation2] sm:$0xff]
    %v93 = vld [vmem:[#allocation2 + $0x8] sm:$0xff]
    %v94 = vld [vmem:[#allocation2 + $0x10] sm:$0xff]
    %98 = vrot.lane.b32.xlu0 %v92, 16
    %v99 = vpop.permute.xlu0 %98
    %100 = vrot.lane.b32.xlu0 %v93, 16
    %v101 = vpop.permute.xlu0 %100
    %102 = vrot.lane.b32.xlu0 %v94, 16
    %v103 = vpop.permute.xlu0 %102
    %vm104 = vcmask 130048
    %v105 = vsel %vm104, %v99, %v101
    %v106 = vsel %vm104, %v101, %v103
    %109 = vst [vmem:[#allocation3 + $0x20] sm:$0xff] %v105
    %110 = vst [vmem:[#allocation3 + $0x28] sm:$0xff] %v106
    %v111 = vld [vmem:[#allocation2] sm:$0xff]
    %v112 = vld [vmem:[#allocation2 + $0x8] sm:$0xff]
    %v113 = vld [vmem:[#allocation2 + $0x10] sm:$0xff]
    %117 = vrot.lane.b32.xlu0 %v111, 15
    %v118 = vpop.permute.xlu0 %117
    %119 = vrot.lane.b32.xlu0 %v112, 15
    %v120 = vpop.permute.xlu0 %119
    %121 = vrot.lane.b32.xlu0 %v113, 15
    %v122 = vpop.permute.xlu0 %121
    %vm123 = vcmask 121856
    %v124 = vsel %vm123, %v118, %v120
    %v125 = vsel %vm123, %v120, %v122
    %v128 = vsel %vm69, %v124, 1.0
    %v129 = vsel %vm70, %v125, 1.0
    %130 = vst [vmem:[#allocation3 + $0x40] sm:$0xff] %v128
    %131 = vst [vmem:[#allocation3 + $0x48] sm:$0xff] %v129
    %v132 = vld [vmem:[#allocation2] sm:$0xff]
    %v133 = vld [vmem:[#allocation2 + $0x8] sm:$0xff]
    %v134 = vld [vmem:[#allocation2 + $0x10] sm:$0xff]
    %138 = vrot.lane.b32.xlu0 %v132, 1
    %v139 = vpop.permute.xlu0 %138
    %140 = vrot.lane.b32.xlu0 %v133, 1
    %v141 = vpop.permute.xlu0 %140
    %142 = vrot.lane.b32.xlu0 %v134, 1
    %v143 = vpop.permute.xlu0 %142
    %vm144 = vcmask 7168
    %v145 = vsel %vm144, %v139, %v141
    %v146 = vsel %vm144, %v141, %v143
    %v149 = vsel %vm67, %v145, 1.0
    %v150 = vsel %vm68, %v146, 1.0
    %151 = vst [vmem:[#allocation3 + $0x60] sm:$0xff] %v149
    %152 = vst [vmem:[#allocation3 + $0x68] sm:$0xff] %v150
    %v153 = vld [vmem:[#allocation2 + $0x8] sm:$0xff]
    %v154 = vld [vmem:[#allocation2 + $0x10] sm:$0xff]
    %155 = vst [vmem:[#allocation3 + $0x80] sm:$0xff] %v153
    %156 = vst [vmem:[#allocation3 + $0x88] sm:$0xff] %v154
    %v157 = vld [vmem:[#allocation2 + $0x8] sm:$0xff]
    %v158 = vld [vmem:[#allocation2 + $0x10] sm:$0xff]
    %v159 = vld [vmem:[#allocation2 + $0x18] sm:$0xff]
    %163 = vrot.lane.b32.xlu0 %v157, 127
    %v164 = vpop.permute.xlu0 %163
    %165 = vrot.lane.b32.xlu0 %v158, 127
    %v166 = vpop.permute.xlu0 %165
    %167 = vrot.lane.b32.xlu0 %v159, 127
    %v168 = vpop.permute.xlu0 %167
    %vm169 = vcmask 1039360
    %v170 = vsel %vm169, %v164, %v166
    %v171 = vsel %vm169, %v166, %v168
    %v174 = vsel %vm69, %v170, 1.0
    %v175 = vsel %vm70, %v171, 1.0
    %176 = vst [vmem:[#allocation3 + $0xa0] sm:$0xff] %v174
    %177 = vst [vmem:[#allocation3 + $0xa8] sm:$0xff] %v175
    %v178 = vld [vmem:[#allocation2 + $0x8] sm:$0xff]
    %v179 = vld [vmem:[#allocation2 + $0x10] sm:$0xff]
    %v180 = vld [vmem:[#allocation2 + $0x18] sm:$0xff]
    %184 = vrot.lane.b32.xlu0 %v178, 113
    %v185 = vpop.permute.xlu0 %184
    %186 = vrot.lane.b32.xlu0 %v179, 113
    %v187 = vpop.permute.xlu0 %186
    %188 = vrot.lane.b32.xlu0 %v180, 113
    %v189 = vpop.permute.xlu0 %188
    %vm190 = vcmask 924672
    %v191 = vsel %vm190, %v185, %v187
    %v192 = vsel %vm190, %v187, %v189
    %v195 = vsel %vm67, %v191, 1.0
    %v196 = vsel %vm68, %v192, 1.0
    %197 = vst [vmem:[#allocation3 + $0xc0] sm:$0xff] %v195
    %198 = vst [vmem:[#allocation3 + $0xc8] sm:$0xff] %v196
    %v199 = vld [vmem:[#allocation2 + $0x8] sm:$0xff]
    %v200 = vld [vmem:[#allocation2 + $0x10] sm:$0xff]
    %v201 = vld [vmem:[#allocation2 + $0x18] sm:$0xff]
    %205 = vrot.lane.b32.xlu0 %v199, 112
    %v206 = vpop.permute.xlu0 %205
    %207 = vrot.lane.b32.xlu0 %v200, 112
    %v208 = vpop.permute.xlu0 %207
    %209 = vrot.lane.b32.xlu0 %v201, 112
    %v210 = vpop.permute.xlu0 %209
    %vm211 = vcmask 916480
    %v212 = vsel %vm211, %v206, %v208
    %v213 = vsel %vm211, %v208, %v210
    %216 = vst [vmem:[#allocation3 + $0xe0] sm:$0xff] %v212
    %217 = vst [vmem:[#allocation3 + $0xe8] sm:$0xff] %v213
    %v218 = vld [vmem:[#allocation2 + $0x8] sm:$0xff]
    %v219 = vld [vmem:[#allocation2 + $0x10] sm:$0xff]
    %v220 = vld [vmem:[#allocation2 + $0x18] sm:$0xff]
    %224 = vrot.lane.b32.xlu0 %v218, 111
    %v225 = vpop.permute.xlu0 %224
    %226 = vrot.lane.b32.xlu0 %v219, 111
    %v227 = vpop.permute.xlu0 %226
    %228 = vrot.lane.b32.xlu0 %v220, 111
    %v229 = vpop.permute.xlu0 %228
    %vm230 = vcmask 908288
    %v231 = vsel %vm230, %v225, %v227
    %v232 = vsel %vm230, %v227, %v229
    %v235 = vsel %vm69, %v231, 1.0
    %v236 = vsel %vm70, %v232, 1.0
    %237 = vst [vmem:[#allocation3 + $0x100] sm:$0xff] %v235
    %238 = vst [vmem:[#allocation3 + $0x108] sm:$0xff] %v236
    %s239 = scalar_lea.vmem [#allocation2], 32
    %v240 = vld [vmem:[%s239] sm:$0xff]
    %v241 = vld [vmem:[%s239 + $0x8] sm:$0xff]
    %v242 = vld [vmem:[%s239 + $0x10] sm:$0xff]
    %246 = vrot.lane.b32.xlu0 %v240, 17
    %v247 = vpop.permute.xlu0 %246
    %248 = vrot.lane.b32.xlu0 %v241, 17
    %v249 = vpop.permute.xlu0 %248
    %250 = vrot.lane.b32.xlu0 %v242, 17
    %v251 = vpop.permute.xlu0 %250
    %v252 = vsel %vm83, %v247, %v249
    %v253 = vsel %vm83, %v249, %v251
    %v256 = vsel %vm67, %v252, 1.0
    %v257 = vsel %vm68, %v253, 1.0
    %258 = vst [vmem:[#allocation3 + $0x10] sm:$0xff] %v256
    %259 = vst [vmem:[#allocation3 + $0x18] sm:$0xff] %v257
    %v260 = vld [vmem:[%s239] sm:$0xff]
    %v261 = vld [vmem:[%s239 + $0x8] sm:$0xff]
    %v262 = vld [vmem:[%s239 + $0x10] sm:$0xff]
    %266 = vrot.lane.b32.xlu0 %v260, 16
    %v267 = vpop.permute.xlu0 %266
    %268 = vrot.lane.b32.xlu0 %v261, 16
    %v269 = vpop.permute.xlu0 %268
    %270 = vrot.lane.b32.xlu0 %v262, 16
    %v271 = vpop.permute.xlu0 %270
    %v272 = vsel %vm104, %v267, %v269
    %v273 = vsel %vm104, %v269, %v271
    %276 = vst [vmem:[#allocation3 + $0x30] sm:$0xff] %v272
    %277 = vst [vmem:[#allocation3 + $0x38] sm:$0xff] %v273
    %v278 = vld [vmem:[%s239] sm:$0xff]
    %v279 = vld [vmem:[%s239 + $0x8] sm:$0xff]
    %v280 = vld [vmem:[%s239 + $0x10] sm:$0xff]
    %284 = vrot.lane.b32.xlu0 %v278, 15
    %v285 = vpop.permute.xlu0 %284
    %286 = vrot.lane.b32.xlu0 %v279, 15
    %v287 = vpop.permute.xlu0 %286
    %288 = vrot.lane.b32.xlu0 %v280, 15
    %v289 = vpop.permute.xlu0 %288
    %v290 = vsel %vm123, %v285, %v287
    %v291 = vsel %vm123, %v287, %v289
    %v294 = vsel %vm69, %v290, 1.0
    %v295 = vsel %vm70, %v291, 1.0
    %296 = vst [vmem:[#allocation3 + $0x50] sm:$0xff] %v294
    %297 = vst [vmem:[#allocation3 + $0x58] sm:$0xff] %v295
    %v298 = vld [vmem:[%s239] sm:$0xff]
    %v299 = vld [vmem:[%s239 + $0x8] sm:$0xff]
    %v300 = vld [vmem:[%s239 + $0x10] sm:$0xff]
    %304 = vrot.lane.b32.xlu0 %v298, 1
    %v305 = vpop.permute.xlu0 %304
    %306 = vrot.lane.b32.xlu0 %v299, 1
    %v307 = vpop.permute.xlu0 %306
    %308 = vrot.lane.b32.xlu0 %v300, 1
    %v309 = vpop.permute.xlu0 %308
    %v310 = vsel %vm144, %v305, %v307
    %v311 = vsel %vm144, %v307, %v309
    %v314 = vsel %vm67, %v310, 1.0
    %v315 = vsel %vm68, %v311, 1.0
    %316 = vst [vmem:[#allocation3 + $0x70] sm:$0xff] %v314
    %317 = vst [vmem:[#allocation3 + $0x78] sm:$0xff] %v315
    %v318 = vld [vmem:[%s239 + $0x8] sm:$0xff]
    %v319 = vld [vmem:[%s239 + $0x10] sm:$0xff]
    %320 = vst [vmem:[#allocation3 + $0x90] sm:$0xff] %v318
    %321 = vst [vmem:[#allocation3 + $0x98] sm:$0xff] %v319
    %v322 = vld [vmem:[%s239 + $0x8] sm:$0xff]
    %v323 = vld [vmem:[%s239 + $0x10] sm:$0xff]
    %v324 = vld [vmem:[%s239 + $0x18] sm:$0xff]
    %328 = vrot.lane.b32.xlu0 %v322, 127
    %v329 = vpop.permute.xlu0 %328
    %330 = vrot.lane.b32.xlu0 %v323, 127
    %v331 = vpop.permute.xlu0 %330
    %332 = vrot.lane.b32.xlu0 %v324, 127
    %v333 = vpop.permute.xlu0 %332
    %v334 = vsel %vm169, %v329, %v331
    %v335 = vsel %vm169, %v331, %v333
    %v338 = vsel %vm69, %v334, 1.0
    %v339 = vsel %vm70, %v335, 1.0
    %340 = vst [vmem:[#allocation3 + $0xb0] sm:$0xff] %v338
    %341 = vst [vmem:[#allocation3 + $0xb8] sm:$0xff] %v339
    %v342 = vld [vmem:[%s239 + $0x8] sm:$0xff]
    %v343 = vld [vmem:[%s239 + $0x10] sm:$0xff]
    %v344 = vld [vmem:[%s239 + $0x18] sm:$0xff]
    %348 = vrot.lane.b32.xlu0 %v342, 113
    %v349 = vpop.permute.xlu0 %348
    %350 = vrot.lane.b32.xlu0 %v343, 113
    %v351 = vpop.permute.xlu0 %350
    %352 = vrot.lane.b32.xlu0 %v344, 113
    %v353 = vpop.permute.xlu0 %352
    %v354 = vsel %vm190, %v349, %v351
    %v355 = vsel %vm190, %v351, %v353
    %v358 = vsel %vm67, %v354, 1.0
    %v359 = vsel %vm68, %v355, 1.0
    %360 = vst [vmem:[#allocation3 + $0xd0] sm:$0xff] %v358
    %361 = vst [vmem:[#allocation3 + $0xd8] sm:$0xff] %v359
    %v362 = vld [vmem:[%s239 + $0x8] sm:$0xff]
    %v363 = vld [vmem:[%s239 + $0x10] sm:$0xff]
    %v364 = vld [vmem:[%s239 + $0x18] sm:$0xff]
    %368 = vrot.lane.b32.xlu0 %v362, 112
    %v369 = vpop.permute.xlu0 %368
    %370 = vrot.lane.b32.xlu0 %v363, 112
    %v371 = vpop.permute.xlu0 %370
    %372 = vrot.lane.b32.xlu0 %v364, 112
    %v373 = vpop.permute.xlu0 %372
    %v374 = vsel %vm211, %v369, %v371
    %v375 = vsel %vm211, %v371, %v373
    %378 = vst [vmem:[#allocation3 + $0xf0] sm:$0xff] %v374
    %379 = vst [vmem:[#allocation3 + $0xf8] sm:$0xff] %v375
    %v380 = vld [vmem:[%s239 + $0x8] sm:$0xff]
    %v381 = vld [vmem:[%s239 + $0x10] sm:$0xff]
    %v382 = vld [vmem:[%s239 + $0x18] sm:$0xff]
    %386 = vrot.lane.b32.xlu0 %v380, 111
    %v387 = vpop.permute.xlu0 %386
    %388 = vrot.lane.b32.xlu0 %v381, 111
    %v389 = vpop.permute.xlu0 %388
    %390 = vrot.lane.b32.xlu0 %v382, 111
    %v391 = vpop.permute.xlu0 %390
    %v392 = vsel %vm230, %v387, %v389
    %v393 = vsel %vm230, %v389, %v391
    %v396 = vsel %vm69, %v392, 1.0
    %v397 = vsel %vm70, %v393, 1.0
    %398 = vst [vmem:[#allocation3 + $0x110] sm:$0xff] %v396
    %399 = vst [vmem:[#allocation3 + $0x118] sm:$0xff] %v397
    %v400 = vld [vmem:[#allocation7] sm:$0xff]
    %v401 = vld [vmem:[#allocation3] sm:$0xff]
    %v402 = vld [vmem:[#allocation3 + $0x8] sm:$0xff]
    %v403 = vld [vmem:[#allocation3 + $0x10] sm:$0xff]
    %v404 = vld [vmem:[#allocation3 + $0x18] sm:$0xff]
    %v405 = vld [vmem:[#allocation3 + $0x20] sm:$0xff]
    %v406 = vld [vmem:[#allocation3 + $0x28] sm:$0xff]
    %v407 = vld [vmem:[#allocation3 + $0x30] sm:$0xff]
    %v408 = vld [vmem:[#allocation3 + $0x38] sm:$0xff]
    %v409 = vld [vmem:[#allocation3 + $0x40] sm:$0xff]
    %v410 = vld [vmem:[#allocation3 + $0x48] sm:$0xff]
    %v411 = vld [vmem:[#allocation3 + $0x50] sm:$0xff]
    %v412 = vld [vmem:[#allocation3 + $0x58] sm:$0xff]
    %v413 = vld [vmem:[#allocation3 + $0x60] sm:$0xff]
    %v414 = vld [vmem:[#allocation3 + $0x68] sm:$0xff]
    %v415 = vld [vmem:[#allocation3 + $0x70] sm:$0xff]
    %v416 = vld [vmem:[#allocation3 + $0x78] sm:$0xff]
    %v417 = vld [vmem:[#allocation3 + $0x80] sm:$0xff]
    %v418 = vld [vmem:[#allocation3 + $0x88] sm:$0xff]
    %v419 = vld [vmem:[#allocation3 + $0x90] sm:$0xff]
    %v420 = vld [vmem:[#allocation3 + $0x98] sm:$0xff]
    %v421 = vld [vmem:[#allocation3 + $0xa0] sm:$0xff]
    %v422 = vld [vmem:[#allocation3 + $0xa8] sm:$0xff]
    %v423 = vld [vmem:[#allocation3 + $0xb0] sm:$0xff]
    %v424 = vld [vmem:[#allocation3 + $0xb8] sm:$0xff]
    %v425 = vld [vmem:[#allocation3 + $0xc0] sm:$0xff]
    %v426 = vld [vmem:[#allocation3 + $0xc8] sm:$0xff]
    %v427 = vld [vmem:[#allocation3 + $0xd0] sm:$0xff]
    %v428 = vld [vmem:[#allocation3 + $0xd8] sm:$0xff]
    %v429 = vld [vmem:[#allocation3 + $0xe0] sm:$0xff]
    %v430 = vld [vmem:[#allocation3 + $0xe8] sm:$0xff]
    %v431 = vld [vmem:[#allocation3 + $0xf0] sm:$0xff]
    %v432 = vld [vmem:[#allocation3 + $0xf8] sm:$0xff]
    %v433 = vld [vmem:[#allocation3 + $0x100] sm:$0xff]
    %v434 = vld [vmem:[#allocation3 + $0x108] sm:$0xff]
    %v435 = vld [vmem:[#allocation3 + $0x110] sm:$0xff]
    %v436 = vld [vmem:[#allocation3 + $0x118] sm:$0xff]
    %vm437 = vcmask 588800
    %v439 = vsel %vm437, %v400, 0
    %441 = vmatprep.subr.mxu0 %v402
    %442 = vmatpush1.msra.mxu0 %v401
    %443 = vmatprep.subr.mxu0 %v406
    %444 = vmatpush1.msra.mxu0 %v405
    %445 = vmatprep.subr.mxu0 %v410
    %446 = vmatpush1.msra.mxu0 %v409
    %447 = vmatprep.subr.mxu0 %v414
    %448 = vmatpush1.msra.mxu0 %v413
    %449 = vmatprep.subr.mxu0 %v418
    %450 = vmatpush1.msra.mxu0 %v417
    %451 = vmatprep.subr.mxu0 %v422
    %452 = vmatpush1.msra.mxu0 %v421
    %453 = vmatprep.subr.mxu0 %v426
    %454 = vmatpush1.msra.mxu0 %v425
    %455 = vmatprep.subr.mxu0 %v430
    %456 = vmatpush1.msra.mxu0 %v429
    %457 = vmatprep.subr.mxu0 %v434
    %458 = vmatpush1.msra.mxu0 %v433
    %459 = vmatprep.subr.mxu0 0.0
    %460 = vmatpush1.msra.mxu0 0.0
    %461 = vmatprep.subr.mxu0 0.0
    %462 = vmatpush1.msra.mxu0 0.0
    %463 = vmatprep.subr.mxu0 0.0
    %464 = vmatpush1.msra.mxu0 0.0
    %465 = vmatprep.subr.mxu0 0.0
    %466 = vmatpush1.msra.mxu0 0.0
    %467 = vmatprep.subr.mxu0 0.0
    %468 = vmatpush1.msra.mxu0 0.0
    %469 = vmatprep.subr.mxu0 0.0
    %470 = vmatpush1.msra.mxu0 0.0
    %471 = vmatprep.subr.mxu0 0.0
    %472 = vmatpush1.msra.mxu0 0.0
    %473 = vmatprep.subr.mxu0 0.0
    %474 = vmatpush1.msra.mxu0 0.0
    %475 = vmatprep.subr.mxu0 0.0
    %476 = vmatpush1.msra.mxu0 0.0
    %477 = vmatprep.subr.mxu0 0.0
    %478 = vmatpush1.msra.mxu0 0.0
    %479 = vmatprep.subr.mxu0 0.0
    %480 = vmatpush1.msra.mxu0 0.0
    %481 = vmatprep.subr.mxu0 0.0
    %482 = vmatpush1.msra.mxu0 0.0
    %483 = vmatprep.subr.mxu0 0.0
    %484 = vmatpush1.msra.mxu0 0.0
    %485 = vmatprep.subr.mxu0 0.0
    %486 = vmatpush1.msra.mxu0 0.0
    %487 = vmatprep.subr.mxu0 0.0
    %488 = vmatpush1.msra.mxu0 0.0
    %489 = vmatprep.subr.mxu0 0.0
    %490 = vmatpush1.msra.mxu0 0.0
    %491 = vmatprep.subr.mxu0 0.0
    %492 = vmatpush1.msra.mxu0 0.0
    %493 = vmatprep.subr.mxu0 0.0
    %494 = vmatpush1.msra.mxu0 0.0
    %495 = vmatprep.subr.mxu0 0.0
    %496 = vmatpush1.msra.mxu0 0.0
    %497 = vmatprep.subr.mxu0 0.0
    %498 = vmatpush1.msra.mxu0 0.0
    %499 = vmatprep.subr.mxu0 0.0
    %500 = vmatpush1.msra.mxu0 0.0
    %501 = vmatprep.subr.mxu0 0.0
    %502 = vmatpush1.msra.mxu0 0.0
    %503 = vmatprep.subr.mxu0 0.0
    %504 = vmatpush1.msra.mxu0 0.0
    %505 = vmatprep.mubr.f32.mxu0 0.0
    %506 = vmatmul.mubr.f32.gmra.mrb[0].mxu0 %v439
    %v507 = vpop.f32.mrb[0].mxu0
    %v508 = vadd.f32 0.0, %v507
    %v509 = vpop.f32.mrb[0].mxu0
    %v510 = vadd.f32 0.0, %v509
    %511 = vdwg.mxu0
    %512 = vmatprep.subr.mxu0 %v404
    %513 = vmatpush1.msra.mxu0 %v403
    %514 = vmatprep.subr.mxu0 %v408
    %515 = vmatpush1.msra.mxu0 %v407
    %516 = vmatprep.subr.mxu0 %v412
    %517 = vmatpush1.msra.mxu0 %v411
    %518 = vmatprep.subr.mxu0 %v416
    %519 = vmatpush1.msra.mxu0 %v415
    %520 = vmatprep.subr.mxu0 %v420
    %521 = vmatpush1.msra.mxu0 %v419
    %522 = vmatprep.subr.mxu0 %v424
    %523 = vmatpush1.msra.mxu0 %v423
    %524 = vmatprep.subr.mxu0 %v428
    %525 = vmatpush1.msra.mxu0 %v427
    %526 = vmatprep.subr.mxu0 %v432
    %527 = vmatpush1.msra.mxu0 %v431
    %528 = vmatprep.subr.mxu0 %v436
    %529 = vmatpush1.msra.mxu0 %v435
    %530 = vmatprep.subr.mxu0 0.0
    %531 = vmatpush1.msra.mxu0 0.0
    %532 = vmatprep.subr.mxu0 0.0
    %533 = vmatpush1.msra.mxu0 0.0
    %534 = vmatprep.subr.mxu0 0.0
    %535 = vmatpush1.msra.mxu0 0.0
    %536 = vmatprep.subr.mxu0 0.0
    %537 = vmatpush1.msra.mxu0 0.0
    %538 = vmatprep.subr.mxu0 0.0
    %539 = vmatpush1.msra.mxu0 0.0
    %540 = vmatprep.subr.mxu0 0.0
    %541 = vmatpush1.msra.mxu0 0.0
    %542 = vmatprep.subr.mxu0 0.0
    %543 = vmatpush1.msra.mxu0 0.0
    %544 = vmatprep.subr.mxu0 0.0
    %545 = vmatpush1.msra.mxu0 0.0
    %546 = vmatprep.subr.mxu0 0.0
    %547 = vmatpush1.msra.mxu0 0.0
    %548 = vmatprep.subr.mxu0 0.0
    %549 = vmatpush1.msra.mxu0 0.0
    %550 = vmatprep.subr.mxu0 0.0
    %551 = vmatpush1.msra.mxu0 0.0
    %552 = vmatprep.subr.mxu0 0.0
    %553 = vmatpush1.msra.mxu0 0.0
    %554 = vmatprep.subr.mxu0 0.0
    %555 = vmatpush1.msra.mxu0 0.0
    %556 = vmatprep.subr.mxu0 0.0
    %557 = vmatpush1.msra.mxu0 0.0
    %558 = vmatprep.subr.mxu0 0.0
    %559 = vmatpush1.msra.mxu0 0.0
    %560 = vmatprep.subr.mxu0 0.0
    %561 = vmatpush1.msra.mxu0 0.0
    %562 = vmatprep.subr.mxu0 0.0
    %563 = vmatpush1.msra.mxu0 0.0
    %564 = vmatprep.subr.mxu0 0.0
    %565 = vmatpush1.msra.mxu0 0.0
    %566 = vmatprep.subr.mxu0 0.0
    %567 = vmatpush1.msra.mxu0 0.0
    %568 = vmatprep.subr.mxu0 0.0
    %569 = vmatpush1.msra.mxu0 0.0
    %570 = vmatprep.subr.mxu0 0.0
    %571 = vmatpush1.msra.mxu0 0.0
    %572 = vmatprep.subr.mxu0 0.0
    %573 = vmatpush1.msra.mxu0 0.0
    %574 = vmatprep.subr.mxu0 0.0
    %575 = vmatpush1.msra.mxu0 0.0
    %576 = vmatprep.mubr.f32.mxu0 0.0
    %577 = vmatmul.mubr.f32.gmra.mrb[0].mxu0 %v439
    %v578 = vpop.f32.mrb[0].mxu0
    %v579 = vadd.f32 0.0, %v578
    %v580 = vpop.f32.mrb[0].mxu0
    %v581 = vadd.f32 0.0, %v580
    %582 = vdwg.mxu0
    %583 = vst [vmem:[#allocation9] sm:$0xff] %v508
    %584 = vst [vmem:[#allocation9 + $0x8] sm:$0xff] %v510
    %s585 = scalar_lea.vmem [#allocation9], 16
    %586 = vst [vmem:[%s585] sm:$0xff] %v579
    %587 = vst [vmem:[%s585 + $0x8] sm:$0xff] %v581
    // Predicated region
    $region18: #{tpu_custom_call.1} parent=1 // pred_check
      _
    $region19: #{tpu_custom_call.1} parent=1 // pred_check_branch
      %589 = sbr.rel (0) target = $region21
    $region20: #{tpu_custom_call.1} parent=1 // pred_region
      %s591 = ssub.s32 512, 512
      %592 = vsyncadd [#allocation6], %s591
      %s593 = sshll.u32 [#allocation9], 4
      %s594 = int_to_ptr.vmem [resolvable:$true] %s593
      %599 = dma.vmem_to_hbm [thread:$0]  %s594, 512, %s2, [#allocation6], 256, 256, 16
    $region21: #{tpu_custom_call.1} parent=1 // pred_fallthru
      _
    // Predicated region
    $region22: #{tpu_custom_call.1} parent=1 // pred_check
      _
    $region23: #{tpu_custom_call.1} parent=1 // pred_check_branch
      %601 = sbr.rel (0) target = $region25
    $region24: #{tpu_custom_call.1} parent=1 // pred_region
      %602 = dma.done [#allocation6], 512
    $region25: #{tpu_custom_call.1} parent=1 // pred_fallthru
      _
    %603 = vsyncpa [#allocation5], 1
    %604 = vsyncpa [#allocation8], 1
    %605 = vsyncpa [#allocation6], 1

</llo_original>
